<compile_context>
chip_gen: v6e
topology: v6e:2x2x1
jax: 0.10.0
libtpu: 0.0.40
codegen_flags: <defaults>
</compile_context>

<pallas_src>
import functools

import jax
import jax.numpy as jnp
from jax.experimental import pallas as pl
from jax.experimental.pallas import tpu as pltpu


def _gated_attn_kernel(x_ref, wab_ref, bab_ref, wc_ref, bc_ref, out_ref, *,
                       hidden_d, reduce_c):
    # Fused hidden projection: x @ [Wa | Wb] on the MXU (bf16 in, f32 acc).
    h = (jnp.dot(x_ref[...], wab_ref[...], preferred_element_type=jnp.float32)
         + bab_ref[...])                                            # [tm, 2D] f32
    a = jnp.tanh(h[:, :hidden_d])                                   # EUP
    b = jax.nn.sigmoid(h[:, hidden_d:])                             # EUP
    gated = a * b                                                   # [tm, D] f32
    if reduce_c:
        # n_classes == 1: lane-sparse [D,1] matmul replaced by a VPU/XLU reduction.
        out = jnp.sum(gated * wc_ref[...], axis=-1, keepdims=True) + bc_ref[...]
    else:
        out = (jnp.dot(gated, wc_ref[...], preferred_element_type=jnp.float32)
               + bc_ref[...])
    out_ref[...] = out.astype(out_ref.dtype)


def _round_up(v, m):
    return (v + m - 1) // m * m


@functools.partial(jax.jit, static_argnames=("block_n", "compute_dtype"))
def attn_net_gated_forward(x, wa, ba, wb, bb, wc, bc, *, block_n=None,
                           compute_dtype=jnp.bfloat16):
    """Gated-attention forward pass.  Returns (A, x) like the nn.Module."""
    N, L = x.shape
    D = wa.shape[1]
    C = wc.shape[1]
    reduce_c = (C == 1)

    if block_n is None:
        # ~1K-row tiles: big enough to amortize per-grid-step overhead and keep the
        # MXU fed, small enough that double-buffered x tiles fit v7x's 64 MiB VMEM
        # (and v5e's 16 MiB default scoped VMEM) at L=1024 bf16.
        block_n = min(1024, _round_up(N, 8))
    block_n = max(8, _round_up(block_n, 8))

    n_pad = _round_up(N, block_n)
    x_k = x.astype(compute_dtype)
    if n_pad != N:
        x_k = jnp.pad(x_k, ((0, n_pad - N), (0, 0)))  # zero rows, sliced off below

    # Fuse the two hidden projections into one [L, 2D] operand.
    wab = jnp.concatenate([wa, wb], axis=1).astype(compute_dtype)   # [L, 2D] bf16
    bab = jnp.concatenate([ba, bb], axis=1).astype(jnp.float32)     # [1, 2D] f32
    wc_k = (wc.T if reduce_c else wc).astype(jnp.float32)           # [1,D] or [D,C]
    bc_k = bc.astype(jnp.float32)                                   # [1, C]

    grid = (n_pad // block_n,)
    itemsize = jnp.dtype(compute_dtype).itemsize
    out_itemsize = x.dtype.itemsize

    cost = pl.CostEstimate(
        flops=2 * n_pad * L * 2 * D + 2 * n_pad * D * C,
        transcendentals=2 * n_pad * D,
        bytes_accessed=(n_pad * L * itemsize                 # x stream
                        + L * 2 * D * itemsize               # fused weight
                        + (2 * D + D * C + C) * 4            # biases + wc
                        + n_pad * C * out_itemsize))         # output

    # Scoped-VMEM hint: double-buffered x/out tiles + resident weights, with slack.
    est_vmem = (2 * (block_n * L * itemsize + block_n * C * 4)
                + 2 * (L * 2 * D * itemsize + D * C * 4 + (2 * D + C) * 4))
    vmem_limit = int(min(max(2 * est_vmem, 32 * 1024 * 1024), 64 * 1024 * 1024))

    kernel = functools.partial(_gated_attn_kernel, hidden_d=D, reduce_c=reduce_c)
    wc_block = (1, D) if reduce_c else (D, C)

    a_out = pl.pallas_call(
        kernel,
        out_shape=jax.ShapeDtypeStruct((n_pad, C), x.dtype),
        grid_spec=pltpu.PrefetchScalarGridSpec(
            num_scalar_prefetch=0,
            grid=grid,
            in_specs=[
                pl.BlockSpec((block_n, L), lambda i: (i, 0)),   # x tile (streamed)
                pl.BlockSpec((L, 2 * D), lambda i: (0, 0)),     # [Wa | Wb] (resident)
                pl.BlockSpec((1, 2 * D), lambda i: (0, 0)),     # [ba | bb]
                pl.BlockSpec(wc_block, lambda i: (0, 0)),       # Wc (row or matrix)
                pl.BlockSpec((1, C), lambda i: (0, 0)),         # bc
            ],
            out_specs=pl.BlockSpec((block_n, C), lambda i: (i, 0)),
        ),
        compiler_params=pltpu.CompilerParams(
            dimension_semantics=("parallel",),
            vmem_limit_bytes=vmem_limit),
        cost_estimate=cost,
    )(x_k, wab, bab, wc_k, bc_k)

    if n_pad != N:
        a_out = a_out[:N]
    # Mirror PyTorch's A.squeeze(-1): only drops the axis when it has size 1.
    A = jnp.squeeze(a_out, axis=-1) if C == 1 else a_out
    return A, x


def init_params(key, L, D, n_classes, dtype=jnp.float32):
    """Deterministic PyTorch-style (uniform +/- 1/sqrt(fan_in)) init."""
    ks = jax.random.split(key, 6)

    def linear(kw, kb, fan_in, fan_out):
        bound = 1.0 / jnp.sqrt(jnp.asarray(fan_in, dtype))
        w = jax.random.uniform(kw, (fan_in, fan_out), dtype, -bound, bound)
        b = jax.random.uniform(kb, (1, fan_out), dtype, -bound, bound)
        return w, b

    wa, ba = linear(ks[0], ks[1], L, D)          # attention_a: Linear(L, D)
    wb, bb = linear(ks[2], ks[3], L, D)          # attention_b: Linear(L, D)
    wc, bc = linear(ks[4], ks[5], D, n_classes)  # attention_c: Linear(D, n_classes)
    return wa, ba, wb, bb, wc, bc


def reference_forward(x, wa, ba, wb, bb, wc, bc, compute_dtype=jnp.bfloat16):
    """Pure-JAX reference using the same bf16-operand / f32-accumulate matmul path."""
    xc = x.astype(compute_dtype)
    a = jnp.tanh(jnp.dot(xc, wa.astype(compute_dtype),
                         preferred_element_type=jnp.float32) + ba)
    b = jax.nn.sigmoid(jnp.dot(xc, wb.astype(compute_dtype),
                               preferred_element_type=jnp.float32) + bb)
    A = (a * b) @ wc + bc
    if A.shape[-1] == 1:
        A = jnp.squeeze(A, axis=-1)
    return A.astype(x.dtype), x


if __name__ == "__main__":
    key = jax.random.PRNGKey(0)
    kx, kp, kp2 = jax.random.split(key, 3)

    # Small shapes consistent with the module (N tokens of dim L -> hidden D -> C).
    # N=24 with block_n=16 exercises the padded last tile + multi-step parallel grid.
    N, L, D = 24, 32, 16

    # Case 1: n_classes = 1 (module default) -> reduction path + squeeze.
    x = jax.random.normal(kx, (N, L), dtype=jnp.float32)
    params1 = init_params(kp, L, D, n_classes=1)
    A1, x_out1 = attn_net_gated_forward(x, *params1, block_n=16)
    jax.block_until_ready((A1, x_out1))
    A1_ref, _ = reference_forward(x, *params1)
    assert A1.shape == (N,), A1.shape
    assert jnp.allclose(A1, A1_ref, atol=1e-3, rtol=1e-3)
    assert jnp.array_equal(x_out1, x)

    # Case 2: n_classes = 2 -> final MXU matmul path, no squeeze.
    params2 = init_params(kp2, L, D, n_classes=2)
    A2, x_out2 = attn_net_gated_forward(x, *params2)
    jax.block_until_ready((A2, x_out2))
    A2_ref, _ = reference_forward(x, *params2)
    assert A2.shape == (N, 2), A2.shape
    assert jnp.allclose(A2, A2_ref, atol=1e-3, rtol=1e-3)
    assert jnp.array_equal(x_out2, x)

    print("KERNEL_OK")
</pallas_src>

<mosaic_0001>
module attributes {stable_mosaic.version = 11 : i64} {
  func.func @_gated_attn_kernel(%arg0: i32, %arg1: memref<16x32xbf16, #tpu.memory_space<vmem>>, %arg2: memref<32x32xbf16, #tpu.memory_space<vmem>>, %arg3: memref<1x32xf32, #tpu.memory_space<vmem>>, %arg4: memref<1x16xf32, #tpu.memory_space<vmem>>, %arg5: memref<1x1xf32, #tpu.memory_space<vmem>>, %arg6: memref<16x1xf32, #tpu.memory_space<vmem>>) attributes {dimension_semantics = [#tpu.dimension_semantics<parallel>], iteration_bounds = array<i64: 2>, scalar_prefetch = 0 : i64, scratch_operands = 0 : i64, tpu.core_type = #tpu.core_type<tc>, window_params = [{transform_indices = @transform_0, window_bounds = array<i64: 16, 32>}, {pipeline_mode = #tpu.pipeline_mode<synchronous>, transform_indices = @transform_1, window_bounds = array<i64: 32, 32>}, {pipeline_mode = #tpu.pipeline_mode<synchronous>, transform_indices = @transform_2, window_bounds = array<i64: 1, 32>}, {pipeline_mode = #tpu.pipeline_mode<synchronous>, transform_indices = @transform_3, window_bounds = array<i64: 1, 16>}, {pipeline_mode = #tpu.pipeline_mode<synchronous>, transform_indices = @transform_4, window_bounds = array<i64: 1, 1>}, {transform_indices = @transform_5, window_bounds = array<i64: 16, 1>}]} {
    %c0 = arith.constant 0 : index
    %c0_0 = arith.constant 0 : index
    %0 = vector.load %arg1[%c0, %c0_0] : memref<16x32xbf16, #tpu.memory_space<vmem>>, vector<16x32xbf16>
    %c0_1 = arith.constant 0 : index
    %c0_2 = arith.constant 0 : index
    %1 = vector.load %arg2[%c0_1, %c0_2] : memref<32x32xbf16, #tpu.memory_space<vmem>>, vector<32x32xbf16>
    %cst = arith.constant dense<0.000000e+00> : vector<16x32xf32>
    %2 = tpu.matmul %0, %1, %cst {dimension_numbers = #tpu.dot_dimension_numbers<[1], [0], [0], [1], [0, 0, 1, 1], [], []>} : vector<16x32xbf16>, vector<32x32xbf16>, vector<16x32xf32> -> vector<16x32xf32>
    %c0_3 = arith.constant 0 : index
    %c0_4 = arith.constant 0 : index
    %3 = vector.load %arg3[%c0_3, %c0_4] : memref<1x32xf32, #tpu.memory_space<vmem>>, vector<1x32xf32>
    %4 = vector.broadcast %3 : vector<1x32xf32> to vector<16x32xf32>
    %5 = arith.addf %2, %4 : vector<16x32xf32>
    %6 = vector.extract_strided_slice %5 {offsets = [0, 0], sizes = [16, 16], strides = [1, 1]} : vector<16x32xf32> to vector<16x16xf32>
    %7 = math.tanh %6 : vector<16x16xf32>
    %8 = vector.extract_strided_slice %5 {offsets = [0, 16], sizes = [16, 16], strides = [1, 1]} : vector<16x32xf32> to vector<16x16xf32>
    %9 = arith.negf %8 : vector<16x16xf32>
    %10 = math.exp %9 : vector<16x16xf32>
    %cst_5 = arith.constant 1.000000e+00 : f32
    %11 = vector.broadcast %cst_5 : f32 to vector<16x16xf32>
    %12 = arith.addf %11, %10 : vector<16x16xf32>
    %13 = arith.divf %11, %12 : vector<16x16xf32>
    %14 = arith.mulf %7, %13 : vector<16x16xf32>
    %c0_6 = arith.constant 0 : index
    %c0_7 = arith.constant 0 : index
    %15 = vector.load %arg4[%c0_6, %c0_7] : memref<1x16xf32, #tpu.memory_space<vmem>>, vector<1x16xf32>
    %16 = vector.broadcast %15 : vector<1x16xf32> to vector<16x16xf32>
    %17 = arith.mulf %14, %16 : vector<16x16xf32>
    %cst_8 = arith.constant dense<0.000000e+00> : vector<16xf32>
    %18 = vector.multi_reduction <add>, %17, %cst_8 [1] : vector<16x16xf32> to vector<16xf32>
    %19 = vector.shape_cast %18 : vector<16xf32> to vector<16x1xf32>
    %c0_9 = arith.constant 0 : index
    %c0_10 = arith.constant 0 : index
    %20 = vector.load %arg5[%c0_9, %c0_10] : memref<1x1xf32, #tpu.memory_space<vmem>>, vector<1x1xf32>
    %21 = vector.broadcast %20 : vector<1x1xf32> to vector<16x1xf32>
    %22 = arith.addf %19, %21 : vector<16x1xf32>
    %c0_11 = arith.constant 0 : index
    %c0_12 = arith.constant 0 : index
    %23 = vector.load %arg6[%c0_11, %c0_12] : memref<16x1xf32, #tpu.memory_space<vmem>>, vector<16x1xf32>
    tpu.vector_store %arg6[%c0_11, %c0_12], %22 {strides = array<i32>} : memref<16x1xf32, #tpu.memory_space<vmem>>, vector<16x1xf32>,
    return
  }
  func.func @transform_0(%arg0: i32) -> (i32, i32) {
    %c0_i32 = arith.constant 0 : i32
    %c0_i32_0 = arith.constant 0 : i32
    return %arg0, %c0_i32 : i32, i32
  }
  func.func @transform_1(%arg0: i32) -> (i32, i32) {
    %c0_i32 = arith.constant 0 : i32
    %c0_i32_0 = arith.constant 0 : i32
    %c0_i32_1 = arith.constant 0 : i32
    return %c0_i32, %c0_i32_0 : i32, i32
  }
  func.func @transform_2(%arg0: i32) -> (i32, i32) {
    %c0_i32 = arith.constant 0 : i32
    %c0_i32_0 = arith.constant 0 : i32
    %c0_i32_1 = arith.constant 0 : i32
    return %c0_i32, %c0_i32_0 : i32, i32
  }
  func.func @transform_3(%arg0: i32) -> (i32, i32) {
    %c0_i32 = arith.constant 0 : i32
    %c0_i32_0 = arith.constant 0 : i32
    %c0_i32_1 = arith.constant 0 : i32
    return %c0_i32, %c0_i32_0 : i32, i32
  }
  func.func @transform_4(%arg0: i32) -> (i32, i32) {
    %c0_i32 = arith.constant 0 : i32
    %c0_i32_0 = arith.constant 0 : i32
    %c0_i32_1 = arith.constant 0 : i32
    return %c0_i32, %c0_i32_0 : i32, i32
  }
  func.func @transform_5(%arg0: i32) -> (i32, i32) {
    %c0_i32 = arith.constant 0 : i32
    %c0_i32_0 = arith.constant 0 : i32
    return %arg0, %c0_i32 : i32, i32
  }
}

</mosaic_0001>

<llo_original>
// kernel: attn_net_gated_forward.1
$region0: #{attn_net_gated_forward.1}
  #allocation0 [shape = 'u32[]', space=smem, size = 0x4, offset = 0x4, fixed_abs, tag = 'smem constant byte address 0x4 - core index']
  #allocation1 [shape = 'u32[144,128]{1,0:T(1,128)}', space=vmem, size = 0x12000, scoped, tag = 'internal scratch']
  #allocation2 [shape = 'f32[1,1]{1,0:T(1,128)S(1)}', space=vmem, size = 0x200, scoped, tag = 'scoped memory for attn_net_gated_forward.1']
  %s0 = inlined_call_operand.vmem [shape: bf16[32,32], index: 0, kind: input, shape index: {}]
  %s1 = inlined_call_operand.vmem [shape: bf16[32,32], index: 1, kind: input, shape index: {}]
  %s2 = inlined_call_operand.vmem [shape: f32[1,32], index: 2, kind: input, shape index: {}]
  %s3 = inlined_call_operand.vmem [shape: f32[1,16], index: 3, kind: input, shape index: {}]
  %s4 = inlined_call_operand.<no memory space> [shape: f32[1,1], index: 4, kind: input, shape index: {}]
  %s5 = inlined_call_operand.vmem [shape: f32[32,1], index: 5, kind: output, shape index: {}]
  %s6 = sld [smem:[#allocation0]]
  $region53: #{attn_net_gated_forward.1} parent=0
    _
  %s8 = ssub.s32 1, %s6
  %s9 = scalar_select 0, %s8, %s6
  %v10 = vstv %s4
  %11 = vst [vmem:[#allocation2] sm:$0x1] %v10
  loop: start=0, step=1, limit=4
  $region2: #{attn_net_gated_forward.1} parent=0 // loop_pre_header
    _
  $region3: #{attn_net_gated_forward.1} parent=0 // loop_header
    %s13 = sphi 0, %s17
    %p14 = scmp.ge.s32.totalorder %s13, 4
    %s23 = sphi 0, %s25
    %s26 = sphi 0, %s23
    %s27 = sphi 0, %s26
    %s43 = sphi 0, %s27
    %s47 = sphi 0, %s47
    %s49 = sphi 0, %s47
    %s50 = sphi 0, %s49
    %s64 = sphi 0, %s50
    %s68 = sphi 0, %s68
    %s70 = sphi 0, %s68
    %s71 = sphi 0, %s70
    %s85 = sphi 0, %s71
    %s89 = sphi 0, %s89
    %s91 = sphi 0, %s89
    %s92 = sphi 0, %s91
    %s106 = sphi 0, %s92
    %s110 = sphi 0, %s110
    %s112 = sphi 0, %s110
    %s113 = sphi 0, %s112
    %s127 = sphi 0, %s113
    %s133 = sphi 0, %s135
    %s136 = sphi 0, %s133
    %s137 = sphi 0, %s136
    %s153 = sphi 0, %s137
  $region4: #{attn_net_gated_forward.1} parent=0 // loop_header_branch
    %16 = sbr.rel (%p14) target = $region8
  $region5: #{attn_net_gated_forward.1} parent=0 // loop_body
    %s18 = ssub.s32 %s13, 1
    %s19 = ssub.s32 %s13, 2
    %s20 = sadd.s32 %s13, 1
    %s21 = ssub.s32 %s13, %s20
    %p22 = scmp.eq.s32.totalorder %s21, 0
    %s24 = sadd.s32 %s23, 1
    %s25 = scalar_select %p22, %s23, %s24
    %p28 = pneg %p22
    %p29 = scmp.eq.s32.totalorder %s13, 1
    %p30 = por %p28, %p29
    %p31 = scmp.ne.s32.totalorder %s23, %s26
    %p32 = scmp.eq.s32.totalorder %s13, 0
    %p33 = por %p31, %p32
    %p34 = scmp.ne.s32.totalorder %s23, %s26
    %p35 = scmp.eq.s32.totalorder %s18, 1
    %p36 = por %p34, %p35
    %p37 = scmp.ne.s32.totalorder %s26, %s27
    %p38 = scmp.eq.s32.totalorder %s18, 0
    %p39 = por %p37, %p38
    %p40 = scmp.ne.s32.totalorder %s26, %s27
    %p41 = scmp.eq.s32.totalorder %s19, 1
    %p42 = por %p40, %p41
    %p44 = scmp.ne.s32.totalorder %s27, %s43
    %p45 = scmp.eq.s32.totalorder %s19, 0
    %p46 = por %p44, %p45
    %s48 = sadd.s32 %s47, 1
    %p51 = scmp.eq.s32.totalorder %s13, 1
    %p52 = scmp.ne.s32.totalorder %s47, %s49
    %p53 = scmp.eq.s32.totalorder %s13, 0
    %p54 = por %p52, %p53
    %p55 = scmp.ne.s32.totalorder %s47, %s49
    %p56 = scmp.eq.s32.totalorder %s18, 1
    %p57 = por %p55, %p56
    %p58 = scmp.ne.s32.totalorder %s49, %s50
    %p59 = scmp.eq.s32.totalorder %s18, 0
    %p60 = por %p58, %p59
    %p61 = scmp.ne.s32.totalorder %s49, %s50
    %p62 = scmp.eq.s32.totalorder %s19, 1
    %p63 = por %p61, %p62
    %p65 = scmp.ne.s32.totalorder %s50, %s64
    %p66 = scmp.eq.s32.totalorder %s19, 0
    %p67 = por %p65, %p66
    %s69 = sadd.s32 %s68, 1
    %p72 = scmp.eq.s32.totalorder %s13, 1
    %p73 = scmp.ne.s32.totalorder %s68, %s70
    %p74 = scmp.eq.s32.totalorder %s13, 0
    %p75 = por %p73, %p74
    %p76 = scmp.ne.s32.totalorder %s68, %s70
    %p77 = scmp.eq.s32.totalorder %s18, 1
    %p78 = por %p76, %p77
    %p79 = scmp.ne.s32.totalorder %s70, %s71
    %p80 = scmp.eq.s32.totalorder %s18, 0
    %p81 = por %p79, %p80
    %p82 = scmp.ne.s32.totalorder %s70, %s71
    %p83 = scmp.eq.s32.totalorder %s19, 1
    %p84 = por %p82, %p83
    %p86 = scmp.ne.s32.totalorder %s71, %s85
    %p87 = scmp.eq.s32.totalorder %s19, 0
    %p88 = por %p86, %p87
    %s90 = sadd.s32 %s89, 1
    %p93 = scmp.eq.s32.totalorder %s13, 1
    %p94 = scmp.ne.s32.totalorder %s89, %s91
    %p95 = scmp.eq.s32.totalorder %s13, 0
    %p96 = por %p94, %p95
    %p97 = scmp.ne.s32.totalorder %s89, %s91
    %p98 = scmp.eq.s32.totalorder %s18, 1
    %p99 = por %p97, %p98
    %p100 = scmp.ne.s32.totalorder %s91, %s92
    %p101 = scmp.eq.s32.totalorder %s18, 0
    %p102 = por %p100, %p101
    %p103 = scmp.ne.s32.totalorder %s91, %s92
    %p104 = scmp.eq.s32.totalorder %s19, 1
    %p105 = por %p103, %p104
    %p107 = scmp.ne.s32.totalorder %s92, %s106
    %p108 = scmp.eq.s32.totalorder %s19, 0
    %p109 = por %p107, %p108
    %s111 = sadd.s32 %s110, 1
    %p114 = scmp.eq.s32.totalorder %s13, 1
    %p115 = scmp.ne.s32.totalorder %s110, %s112
    %p116 = scmp.eq.s32.totalorder %s13, 0
    %p117 = por %p115, %p116
    %p118 = scmp.ne.s32.totalorder %s110, %s112
    %p119 = scmp.eq.s32.totalorder %s18, 1
    %p120 = por %p118, %p119
    %p121 = scmp.ne.s32.totalorder %s112, %s113
    %p122 = scmp.eq.s32.totalorder %s18, 0
    %p123 = por %p121, %p122
    %p124 = scmp.ne.s32.totalorder %s112, %s113
    %p125 = scmp.eq.s32.totalorder %s19, 1
    %p126 = por %p124, %p125
    %p128 = scmp.ne.s32.totalorder %s113, %s127
    %p129 = scmp.eq.s32.totalorder %s19, 0
    %p130 = por %p128, %p129
    %s131 = ssub.s32 %s13, %s20
    %p132 = scmp.eq.s32.totalorder %s131, 0
    %s134 = sadd.s32 %s133, 1
    %s135 = scalar_select %p132, %s133, %s134
    %p138 = pneg %p132
    %p139 = scmp.eq.s32.totalorder %s13, 1
    %p140 = por %p138, %p139
    %p141 = scmp.ne.s32.totalorder %s133, %s136
    %p142 = scmp.eq.s32.totalorder %s13, 0
    %p143 = por %p141, %p142
    %p144 = scmp.ne.s32.totalorder %s133, %s136
    %p145 = scmp.eq.s32.totalorder %s18, 1
    %p146 = por %p144, %p145
    %p147 = scmp.ne.s32.totalorder %s136, %s137
    %p148 = scmp.eq.s32.totalorder %s18, 0
    %p149 = por %p147, %p148
    %p150 = scmp.ne.s32.totalorder %s136, %s137
    %p151 = scmp.eq.s32.totalorder %s19, 1
    %p152 = por %p150, %p151
    %p154 = scmp.ne.s32.totalorder %s137, %s153
    %p155 = scmp.eq.s32.totalorder %s19, 0
    %p156 = por %p154, %p155
    %p157 = scmp.le.s32.totalorder 1, %s13
    %p158 = scmp.lt.s32.totalorder %s13, 3
    %p159 = pnand %p157, %p158
    %p160 = pneg %p159
    // Predicated region
    $region9: #{attn_net_gated_forward.1} parent=5 // pred_check
      _
    $region10: #{attn_net_gated_forward.1} parent=5 // pred_check_branch
      %162 = sbr.rel (%p159) target = $region12
    $region11: #{attn_net_gated_forward.1} parent=5 // pred_region
      %s163 = ssub.s32 %s13, 1
      // Predicated region
      $region13: #{attn_net_gated_forward.1} parent=11 // pred_check
        %p164 = pneg %p60
      $region14: #{attn_net_gated_forward.1} parent=11 // pred_check_branch
        %166 = sbr.rel (%p164) target = $region16
      $region15: #{attn_net_gated_forward.1} parent=11 // pred_region
        _
      $region16: #{attn_net_gated_forward.1} parent=11 // pred_fallthru
        _
      // Predicated region
      $region17: #{attn_net_gated_forward.1} parent=11 // pred_check
        %p167 = pneg %p81
      $region18: #{attn_net_gated_forward.1} parent=11 // pred_check_branch
        %169 = sbr.rel (%p167) target = $region20
      $region19: #{attn_net_gated_forward.1} parent=11 // pred_region
        _
      $region20: #{attn_net_gated_forward.1} parent=11 // pred_fallthru
        _
      // Predicated region
      $region21: #{attn_net_gated_forward.1} parent=11 // pred_check
        %p170 = pneg %p102
      $region22: #{attn_net_gated_forward.1} parent=11 // pred_check_branch
        %172 = sbr.rel (%p170) target = $region24
      $region23: #{attn_net_gated_forward.1} parent=11 // pred_region
        _
      $region24: #{attn_net_gated_forward.1} parent=11 // pred_fallthru
        _
      // Predicated region
      $region25: #{attn_net_gated_forward.1} parent=11 // pred_check
        %p173 = pneg %p123
      $region26: #{attn_net_gated_forward.1} parent=11 // pred_check_branch
        %175 = sbr.rel (%p173) target = $region28
      $region27: #{attn_net_gated_forward.1} parent=11 // pred_region
        _
      $region28: #{attn_net_gated_forward.1} parent=11 // pred_fallthru
        _
    $region12: #{attn_net_gated_forward.1} parent=5 // pred_fallthru
      _
    %p176 = scmp.lt.s32.totalorder %s13, 2
    // Predicated region
    $region29: #{attn_net_gated_forward.1} parent=5 // pred_check
      %p177 = pneg %p176
    $region30: #{attn_net_gated_forward.1} parent=5 // pred_check_branch
      %179 = sbr.rel (%p177) target = $region32
    $region31: #{attn_net_gated_forward.1} parent=5 // pred_region
      // Predicated region
      $region33: #{attn_net_gated_forward.1} parent=31 // pred_check
        %p180 = pneg %p33
      $region34: #{attn_net_gated_forward.1} parent=31 // pred_check_branch
        %182 = sbr.rel (%p180) target = $region36
      $region35: #{attn_net_gated_forward.1} parent=31 // pred_region
        %s183 = smul.u32 2, %s13
        %p184 = scmp.lt.s32.totalorder %s183, 3
        %s185 = scalar_select %p184, %s183, 3
        %s186 = smul.addr %s185, 4
        %s187 = scalar_lea.vmem %s0, %s186
        %s188 = smul.u32 2, %s13
      $region36: #{attn_net_gated_forward.1} parent=31 // pred_fallthru
        _
    $region32: #{attn_net_gated_forward.1} parent=5 // pred_fallthru
      _
    %p189 = scmp.le.s32.totalorder 1, %s13
    %p190 = scmp.lt.s32.totalorder %s13, 3
    %p191 = pnand %p189, %p190
    %p192 = pneg %p191
    // Predicated region
    $region37: #{attn_net_gated_forward.1} parent=5 // pred_check
      _
    $region38: #{attn_net_gated_forward.1} parent=5 // pred_check_branch
      %194 = sbr.rel (%p191) target = $region40
    $region39: #{attn_net_gated_forward.1} parent=5 // pred_region
      %s195 = ssub.s32 %s13, 1
      %s196 = smul.u32 2, %s18
      %p197 = scmp.lt.s32.totalorder %s196, 3
      %s198 = scalar_select %p197, %s196, 3
      %s199 = smul.addr %s198, 4
      %s200 = scalar_lea.vmem %s0, %s199
      %p201 = pneg %p39
      %p202 = pneg %p36
      %p203 = pneg %p60
      %p204 = pneg %p57
      %p205 = pneg %p81
      %p206 = pneg %p78
      %p207 = pneg %p102
      %p208 = pneg %p99
      %p209 = pneg %p123
      %p210 = pneg %p120
      %p211 = pneg %p149
      %p212 = pneg %p146
      %s213 = smul.u32 2, %s18
      %p214 = scmp.lt.s32.totalorder %s213, 3
      %s215 = scalar_select %p214, %s213, 3
      %s216 = smul.addr %s215, 8
      %s217 = scalar_lea.vmem %s5, %s216
      %s218 = smul.u32 2, %s18
      %p219 = scmp.lt.s32.totalorder %s218, 3
      %s220 = scalar_select %p219, %s218, 3
      %s221 = smul.addr %s220, 4
      %s222 = scalar_lea.vmem %s0, %s221
      %s223 = smul.u32 2, %s18
      %s224 = smul.u32 2, %s18
      %p225 = scmp.lt.s32.totalorder %s224, 3
      %s226 = scalar_select %p225, %s224, 3
      %s227 = smul.addr %s226, 8
      %s228 = scalar_lea.vmem %s5, %s227
      %s229 = smul.u32 2, %s18
      %v231 = vld [vmem:[%s222] sm:$0xf]
      %v232 = vld [vmem:[%s222 + $0x4] sm:$0xf]
      %v233 = vld [vmem:[%s1] sm:$0xf]
      %v234 = vld [vmem:[%s1 + $0x4] sm:$0xf]
      %v235 = vld [vmem:[%s1 + $0x8] sm:$0xf]
      %v236 = vld [vmem:[%s1 + $0xc] sm:$0xf]
      %v237 = vld [vmem:[%s2] sm:$0x1]
      %v239 = vlaneseq
      %v240 = vshrl.u32 %v239, 7
      %v241 = vsub.s32 0, %v240
      %v242 = vrot.slane %v237, %v241
      %v246 = vunpack.c.l.b16 %v231
      %v247 = vunpack.c.l.b16 %v232
      %v248 = vpack.c.b16 %v247, %v246
      %v253 = vunpack.c.l.b16 %v233
      %v254 = vunpack.c.l.b16 %v234
      %v255 = vunpack.c.l.b16 %v235
      %v256 = vunpack.c.l.b16 %v236
      %v257 = vpack.c.b16 %v254, %v253
      %v258 = vpack.c.b16 %v256, %v255
      %vm261 = vcmask 261120
      %v263 = vsel %vm261, %v248, 0
      %265 = vmatprep.subr.bf16.mxu0 0
      %266 = vmatpush1.bf16.msra.mxu0 0
      %267 = vmatprep.subr.bf16.mxu0 0
      %268 = vmatpush1.bf16.msra.mxu0 0
      %269 = vmatprep.subr.bf16.mxu0 0
      %270 = vmatpush1.bf16.msra.mxu0 0
      %271 = vmatprep.subr.bf16.mxu0 0
      %272 = vmatpush1.bf16.msra.mxu0 0
      %273 = vmatprep.subr.bf16.mxu0 0
      %274 = vmatpush1.bf16.msra.mxu0 0
      %275 = vmatprep.subr.bf16.mxu0 0
      %276 = vmatpush1.bf16.msra.mxu0 0
      %277 = vmatprep.subr.bf16.mxu0 0
      %278 = vmatpush1.bf16.msra.mxu0 %v258
      %279 = vmatprep.subr.bf16.mxu0 0
      %280 = vmatpush1.bf16.msra.mxu0 %v257
      %281 = vmatprep.subr.bf16.mxu0 0
      %282 = vmatpush2.bf16.msra.mxu0 0
      %283 = vmatprep.subr.bf16.mxu0 0
      %284 = vmatpush2.bf16.msra.mxu0 0
      %285 = vmatprep.subr.bf16.mxu0 0
      %286 = vmatpush2.bf16.msra.mxu0 0
      %287 = vmatprep.subr.bf16.mxu0 0
      %288 = vmatpush2.bf16.msra.mxu0 0
      %289 = vmatprep.subr.bf16.mxu0 0
      %290 = vmatpush2.bf16.msra.mxu0 0
      %291 = vmatprep.subr.bf16.mxu0 0
      %292 = vmatpush2.bf16.msra.mxu0 0
      %293 = vmatprep.subr.bf16.mxu0 0
      %294 = vmatpush2.bf16.msra.mxu0 0
      %295 = vmatprep.subr.bf16.mxu0 0
      %296 = vmatpush2.bf16.msra.mxu0 0
      %297 = vmatprep.mubr.bf16.mxu0 0
      %298 = vmatmul.mubr.bf16.gmra.mxu0 %v263
      %v299 = vpop.f32.mrf.mxu0
      %v300 = vadd.f32 %v242, %v299
      %v301 = vpop.f32.mrf.mxu0
      %v302 = vpop.f32.mrf.mxu0
      %v303 = vadd.f32 %v242, %v302
      %v304 = vpop.f32.mrf.mxu0
      %305 = vdwg.mxu0
      %v306 = vtanh.pop %v300
      %v307 = vtanh.pop %v303
      %v308 = vxor.u32 %v300, 2147483648
      %v309 = vxor.u32 %v303, 2147483648
      %v310 = vmul.f32 %v308, 1.442695
      %v311 = vpow.pop %v310
      %v312 = vmul.f32 %v309, 1.442695
      %v313 = vpow.pop %v312
      %v314 = vadd.f32 %v311, 1.0
      %v315 = vadd.f32 %v313, 1.0
      %v316 = vrcp.pop %v314
      %v317 = vmul.f32 1.0, %v316
      %v318 = vrcp.pop %v315
      %v319 = vmul.f32 1.0, %v318
      %322 = vrot.lane.b32.xlu0 %v317, 112
      %v323 = vpop.permute.xlu0 %322
      %324 = vrot.lane.b32.xlu0 %v319, 112
      %v325 = vpop.permute.xlu0 %324
      %v328 = vmul.f32 %v306, %v323
      %v329 = vmul.f32 %v307, %v325
      %v330 = vld [vmem:[%s3] sm:$0x1]
      %v332 = vlaneseq
      %v333 = vshrl.u32 %v332, 7
      %v334 = vsub.s32 0, %v333
      %v335 = vrot.slane %v330, %v334
      %v337 = vmul.f32 %v328, %v335
      %v338 = vmul.f32 %v329, %v335
      %vm339 = vcmask 130048
      %v340 = vsel %vm339, %v337, 0.0
      %341 = vadd.xlane.f32.xlu0 %v340
      %v342 = vpop.xlane.xlu0 %341
      %v343 = vsel %vm339, %v338, 0.0
      %344 = vadd.xlane.f32.xlu0 %v343
      %v345 = vpop.xlane.xlu0 %344
      %v346 = vld [vmem:[#allocation2] sm:$0x1]
      %v348 = vlaneseq
      %v349 = vshrl.u32 %v348, 7
      %v350 = vsub.s32 0, %v349
      %v351 = vrot.slane %v346, %v350
      %v353 = vadd.f32 %v342, %v351
      %v354 = vadd.f32 %v345, %v351
      %vm355 = vcmask 7168
      %356 = vst.msk [vmem:[%s228] sm:$0xff] %vm355, %v353
      %357 = vst.msk [vmem:[%s228 + $0x8] sm:$0xff] %vm355, %v354
      %s358 = smul.u32 2, %s18
      %p359 = scmp.lt.s32.totalorder %s358, 3
      %s360 = scalar_select %p359, %s358, 3
      %s361 = smul.addr %s360, 8
      %s362 = scalar_lea.vmem %s5, %s361
      // Predicated region
      $region41: #{attn_net_gated_forward.1} parent=39 // pred_check
        %p363 = pneg %p146
      $region42: #{attn_net_gated_forward.1} parent=39 // pred_check_branch
        %365 = sbr.rel (%p363) target = $region44
      $region43: #{attn_net_gated_forward.1} parent=39 // pred_region
        %s366 = smul.u32 2, %s18
      $region44: #{attn_net_gated_forward.1} parent=39 // pred_fallthru
        _
    $region40: #{attn_net_gated_forward.1} parent=5 // pred_fallthru
      _
    %p367 = scmp.le.s32.totalorder 2, %s13
    // Predicated region
    $region45: #{attn_net_gated_forward.1} parent=5 // pred_check
      %p368 = pneg %p367
    $region46: #{attn_net_gated_forward.1} parent=5 // pred_check_branch
      %370 = sbr.rel (%p368) target = $region48
    $region47: #{attn_net_gated_forward.1} parent=5 // pred_region
      %s371 = ssub.s32 %s13, 2
      // Predicated region
      $region49: #{attn_net_gated_forward.1} parent=47 // pred_check
        %p372 = pneg %p152
      $region50: #{attn_net_gated_forward.1} parent=47 // pred_check_branch
        %374 = sbr.rel (%p372) target = $region52
      $region51: #{attn_net_gated_forward.1} parent=47 // pred_region
        %s375 = smul.u32 2, %s19
        %p376 = scmp.lt.s32.totalorder %s375, 3
        %s377 = scalar_select %p376, %s375, 3
        %s378 = smul.addr %s377, 8
        %s379 = scalar_lea.vmem %s5, %s378
      $region52: #{attn_net_gated_forward.1} parent=47 // pred_fallthru
        _
    $region48: #{attn_net_gated_forward.1} parent=5 // pred_fallthru
      _
  $region6: #{attn_net_gated_forward.1} parent=0 // loop_footer
    %s17 = sadd.s32 1, %s13
  $region7: #{attn_net_gated_forward.1} parent=0 // loop_footer_branch
    %12 = sbr.rel target = $region3
  $region8: #{attn_net_gated_forward.1} parent=0 // loop_exit
    _

</llo_original>
